<compile_context>
chip_gen: v7x
topology: tpu7x:2x2x1
jax: 0.10.0
libtpu: 0.0.40
codegen_flags: <defaults>
</compile_context>

<pallas_src>
import jax
import jax.numpy as jnp
from jax.experimental import pallas as pl
from jax.experimental.pallas import tpu as pltpu


def _round_up(x, m):
    return ((x + m - 1) // m) * m


def _make_supcon_kernel(*, use_labels, a_true, n_true, ta, inv_temp, scale):
    """Build the per-row-tile SupCon kernel (static config baked in)."""

    def kernel(*refs):
        if use_labels:
            col_lab_ref, row_lab_ref, feat_ref, out_ref = refs
        else:
            mask_ref, feat_ref, out_ref = refs

        n_pad = feat_ref.shape[0]
        row_start = pl.multiple_of(pl.program_id(0) * ta, ta)

        # Anchor tile is a row-slice of the resident contrast features
        # (anchors are a prefix of the contrast rows in both contrast modes).
        a = feat_ref[pl.ds(row_start, ta), :]            # [ta, d_pad]
        c = feat_ref[...]                                # [n_pad, d_pad]

        # sim = (A @ C^T) / temperature : contract over D with no materialized
        # transpose; accumulate in f32 on the MXU.
        sim = jax.lax.dot_general(
            a, c,
            dimension_numbers=(((1,), (1,)), ((), ())),
            preferred_element_type=jnp.float32) * inv_temp          # [ta, n_pad]

        # Masks generated in-kernel (VPU iota + compares, zero HBM traffic).
        col_ids = jax.lax.broadcasted_iota(jnp.int32, (ta, n_pad), 1)
        row_ids = jax.lax.broadcasted_iota(jnp.int32, (ta, n_pad), 0) + row_start
        lmask = jnp.where((col_ids < n_true) & (row_ids != col_ids), 1.0, 0.0)

        if use_labels:
            raw_pos = (row_lab_ref[...] == col_lab_ref[...]).astype(jnp.float32)
        else:
            raw_pos = mask_ref[...]
        pos = raw_pos * lmask                                        # [ta, n_pad]

        # Numerically-stable masked log-softmax, fused so that `log_prob` is
        # never materialized:  mean_log_prob_pos = pos_sum/pos_cnt - log(denom)
        row_max = jnp.max(sim, axis=1, keepdims=True)
        logits = sim - row_max
        denom = jnp.sum(jnp.exp(logits) * lmask, axis=1, keepdims=True)
        log_denom = jnp.log(denom)

        pos_sum = jnp.sum(pos * logits, axis=1, keepdims=True)       # [ta, 1]
        pos_cnt = jnp.sum(pos, axis=1, keepdims=True)                # [ta, 1]

        row_valid = row_ids[:, 0:1] < a_true                         # [ta, 1]
        # Guard 0/0 only for padded rows; real rows keep reference semantics.
        safe_cnt = jnp.where(row_valid, pos_cnt, 1.0)
        mean_log_prob_pos = (pos_sum * pl.reciprocal(safe_cnt, approx=False)
                             - log_denom)

        per_anchor = scale * mean_log_prob_pos                       # [ta, 1]
        per_anchor = jnp.where(row_valid, per_anchor, 0.0)
        # Lane-dense store; wrapper reads column 0.
        out_ref[...] = jnp.broadcast_to(per_anchor, (ta, 128))

    return kernel


def supcon_loss(features, labels=None, mask=None, *, temperature=0.5,
                contrast_mode='all', base_temperature=0.07, block_rows=128):
    """JAX/Pallas port of SupConLoss.forward. Returns a scalar loss."""
    features = jnp.asarray(features)
    if features.ndim < 3:
        raise ValueError('`features` needs to be [bsz, n_views, ...], '
                         'at least 3 dimensions are required')
    if features.ndim > 3:
        features = features.reshape(features.shape[0], features.shape[1], -1)
    bsz, n_views, dim = features.shape

    if labels is not None and mask is not None:
        raise ValueError('Cannot define both `labels` and `mask`')

    contrast_count = n_views
    # torch.cat(torch.unbind(features, 1), 0): view-major stacking -> [N, D]
    contrast_feature = jnp.concatenate(
        [features[:, v] for v in range(n_views)], axis=0)
    n_true = bsz * contrast_count

    if contrast_mode == 'one':
        anchor_count = 1
    elif contrast_mode == 'all':
        anchor_count = contrast_count
    else:
        raise ValueError('Unknown mode: {}'.format(contrast_mode))
    a_true = anchor_count * bsz

    # ---- padding / tiling ---------------------------------------------------
    ta = _round_up(min(int(block_rows), _round_up(a_true, 8)), 8)
    a_pad = _round_up(a_true, ta)
    n_pad = _round_up(max(n_true, a_pad), 128)
    d_pad = _round_up(dim, 128)
    num_tiles = a_pad // ta

    # Features passed ONCE, in their original dtype (bf16 stays bf16).
    feat_p = jnp.zeros((n_pad, d_pad), dtype=features.dtype)
    feat_p = feat_p.at[:n_true, :dim].set(contrast_feature)

    use_labels = mask is None
    if use_labels:
        if labels is None:
            base_labels = jnp.arange(bsz, dtype=jnp.int32)       # eye(bsz) mask
        else:
            labels = jnp.asarray(labels).reshape(-1)
            if labels.shape[0] != bsz:
                raise ValueError('Num of labels does not match num of features')
            base_labels = labels.astype(jnp.int32)
        full_labels = jnp.tile(base_labels, (contrast_count,))   # per contrast row
        col_lab = jnp.full((1, n_pad), -1, dtype=jnp.int32)
        col_lab = col_lab.at[0, :n_true].set(full_labels)
        row_lab = jnp.full((a_pad, 1), -2, dtype=jnp.int32)
        row_lab = row_lab.at[:a_true, 0].set(full_labels[:a_true])
        inputs = (col_lab, row_lab, feat_p)
        in_specs = [
            pl.BlockSpec((1, n_pad), lambda i: (0, 0)),           # resident
            pl.BlockSpec((ta, 1), lambda i: (i, 0)),              # per-tile
            pl.BlockSpec((n_pad, d_pad), lambda i: (0, 0)),       # resident
        ]
    else:
        mask = jnp.asarray(mask, dtype=jnp.float32)
        mask_tiled = jnp.tile(mask, (anchor_count, contrast_count))  # [A, N]
        mask_p = jnp.zeros((a_pad, n_pad), dtype=jnp.float32)
        mask_p = mask_p.at[:a_true, :n_true].set(mask_tiled)
        inputs = (mask_p, feat_p)
        in_specs = [
            pl.BlockSpec((ta, n_pad), lambda i: (i, 0)),          # per-tile
            pl.BlockSpec((n_pad, d_pad), lambda i: (0, 0)),       # resident
        ]

    kernel = _make_supcon_kernel(
        use_labels=use_labels, a_true=a_true, n_true=n_true, ta=ta,
        inv_temp=1.0 / float(temperature),
        scale=-(float(temperature) / float(base_temperature)))

    per_anchor = pl.pallas_call(
        kernel,
        out_shape=jax.ShapeDtypeStruct((a_pad, 128), jnp.float32),
        grid=(num_tiles,),
        in_specs=in_specs,
        out_specs=pl.BlockSpec((ta, 128), lambda i: (i, 0)),
        compiler_params=pltpu.CompilerParams(
            dimension_semantics=("parallel",)),
    )(*inputs)

    # Padded rows were zeroed in-kernel; mean over the true anchor count.
    return jnp.sum(per_anchor[:, 0]) / a_true


def _reference_supcon_loss(features, labels=None, mask=None, *, temperature=0.5,
                           contrast_mode='all', base_temperature=0.07):
    """Pure-JAX reference (mirrors the PyTorch code) for correctness check."""
    bsz, n_views = features.shape[0], features.shape[1]
    features = features.reshape(bsz, n_views, -1)
    if labels is None and mask is None:
        mask = jnp.eye(bsz, dtype=jnp.float32)
    elif labels is not None:
        labels = labels.reshape(-1, 1)
        mask = (labels == labels.T).astype(jnp.float32)
    else:
        mask = mask.astype(jnp.float32)
    contrast_count = n_views
    contrast_feature = jnp.concatenate(
        [features[:, v] for v in range(n_views)], axis=0)
    if contrast_mode == 'one':
        anchor_feature, anchor_count = features[:, 0], 1
    else:
        anchor_feature, anchor_count = contrast_feature, contrast_count
    sim = jnp.matmul(anchor_feature, contrast_feature.T) / temperature
    logits = sim - jnp.max(sim, axis=1, keepdims=True)
    mask = jnp.tile(mask, (anchor_count, contrast_count))
    A, N = mask.shape
    logits_mask = (jnp.arange(A)[:, None] != jnp.arange(N)[None, :]).astype(jnp.float32)
    mask = mask * logits_mask
    exp_logits = jnp.exp(logits) * logits_mask
    log_prob = logits - jnp.log(exp_logits.sum(1, keepdims=True))
    mean_log_prob_pos = (mask * log_prob).sum(1) / mask.sum(1)
    loss = -(temperature / base_temperature) * mean_log_prob_pos
    return loss.reshape(anchor_count, bsz).mean()


if __name__ == "__main__":
    key = jax.random.PRNGKey(0)
    k_feat, k_lab, k_mask = jax.random.split(key, 3)

    bsz, n_views, dim = 8, 2, 32
    # features: [bsz, n_views, dim], L2-normalized (as SupCon expects)
    feats = jax.random.normal(k_feat, (bsz, n_views, dim), dtype=jnp.float32)
    feats = feats / jnp.linalg.norm(feats, axis=-1, keepdims=True)
    labels = jax.random.randint(k_lab, (bsz,), 0, 4)

    # Supervised case (labels), contrast_mode='all'
    out_sup = jax.block_until_ready(supcon_loss(feats, labels=labels))
    ref_sup = _reference_supcon_loss(feats, labels)

    # Unsupervised SimCLR-degenerate case (no labels / no mask)
    out_simclr = jax.block_until_ready(supcon_loss(feats))
    ref_simclr = _reference_supcon_loss(feats)

    # contrast_mode='one'
    out_one = jax.block_until_ready(
        supcon_loss(feats, labels=labels, contrast_mode='one'))
    ref_one = _reference_supcon_loss(feats, labels, contrast_mode='one')

    # Explicit (possibly asymmetric) user mask path
    user_mask = (jax.random.uniform(k_mask, (bsz, bsz)) > 0.5).astype(jnp.float32)
    user_mask = user_mask.at[jnp.arange(bsz), jnp.arange(bsz)].set(1.0)
    out_mask = jax.block_until_ready(supcon_loss(feats, mask=user_mask))
    ref_mask = _reference_supcon_loss(feats, mask=user_mask)

    for got, ref in ((out_sup, ref_sup), (out_simclr, ref_simclr),
                     (out_one, ref_one), (out_mask, ref_mask)):
        assert jnp.allclose(got, ref, rtol=1e-5, atol=1e-5), (got, ref)

    print("KERNEL_OK")
</pallas_src>

<mosaic_0001>
module attributes {stable_mosaic.version = 11 : i64} {
  func.func @kernel(%arg0: i32, %arg1: memref<1x128xi32, #tpu.memory_space<vmem>>, %arg2: memref<16x1xi32, #tpu.memory_space<vmem>>, %arg3: memref<128x128xf32, #tpu.memory_space<vmem>>, %arg4: memref<16x128xf32, #tpu.memory_space<vmem>>) attributes {dimension_semantics = [#tpu.dimension_semantics<parallel>], iteration_bounds = array<i64: 1>, scalar_prefetch = 0 : i64, scratch_operands = 0 : i64, tpu.core_type = #tpu.core_type<tc>, window_params = [{pipeline_mode = #tpu.pipeline_mode<synchronous>, transform_indices = @transform_0, window_bounds = array<i64: 1, 128>}, {transform_indices = @transform_1, window_bounds = array<i64: 16, 1>}, {pipeline_mode = #tpu.pipeline_mode<synchronous>, transform_indices = @transform_2, window_bounds = array<i64: 128, 128>}, {transform_indices = @transform_3, window_bounds = array<i64: 16, 128>}]} {
    %c16_i32 = arith.constant 16 : i32
    %0 = arith.muli %arg0, %c16_i32 : i32
    %1 = tpu.assume_multiple %0, 16 : i32
    %2 = arith.index_cast %1 : i32 to index
    %c0 = arith.constant 0 : index
    %3 = vector.load %arg3[%2, %c0] : memref<128x128xf32, #tpu.memory_space<vmem>>, vector<16x128xf32>
    %c0_0 = arith.constant 0 : index
    %c0_1 = arith.constant 0 : index
    %4 = vector.load %arg3[%c0_0, %c0_1] : memref<128x128xf32, #tpu.memory_space<vmem>>, vector<128x128xf32>
    %cst = arith.constant dense<0.000000e+00> : vector<16x128xf32>
    %5 = tpu.matmul %3, %4, %cst {dimension_numbers = #tpu.dot_dimension_numbers<[1], [1], [0], [0], [0, 0, 1, 0], [], []>} : vector<16x128xf32>, vector<128x128xf32>, vector<16x128xf32> -> vector<16x128xf32>
    %cst_2 = arith.constant 2.000000e+00 : f32
    %6 = vector.broadcast %cst_2 : f32 to vector<16x128xf32>
    %7 = arith.mulf %5, %6 : vector<16x128xf32>
    %8 = tpu.iota {dimensions = array<i32: 1>} : vector<16x128xi32>
    %9 = tpu.iota {dimensions = array<i32: 0>} : vector<16x128xi32>
    %10 = vector.broadcast %1 : i32 to vector<16x128xi32>
    %11 = arith.addi %9, %10 : vector<16x128xi32>
    %c16_i32_3 = arith.constant 16 : i32
    %12 = vector.broadcast %c16_i32_3 : i32 to vector<16x128xi32>
    %13 = arith.cmpi slt, %8, %12 : vector<16x128xi32>
    %14 = arith.cmpi ne, %11, %8 : vector<16x128xi32>
    %15 = arith.andi %13, %14 : vector<16x128xi1>
    %cst_4 = arith.constant 1.000000e+00 : f32
    %cst_5 = arith.constant 0.000000e+00 : f32
    %16 = vector.broadcast %cst_4 : f32 to vector<16x128xf32>
    %17 = vector.broadcast %cst_5 : f32 to vector<16x128xf32>
    %18 = arith.select %15, %16, %17 : vector<16x128xi1>, vector<16x128xf32>
    %c0_6 = arith.constant 0 : index
    %c0_7 = arith.constant 0 : index
    %19 = vector.load %arg2[%c0_6, %c0_7] : memref<16x1xi32, #tpu.memory_space<vmem>>, vector<16x1xi32>
    %c0_8 = arith.constant 0 : index
    %c0_9 = arith.constant 0 : index
    %20 = vector.load %arg1[%c0_8, %c0_9] : memref<1x128xi32, #tpu.memory_space<vmem>>, vector<1x128xi32>
    %21 = vector.broadcast %19 : vector<16x1xi32> to vector<16x128xi32>
    %22 = vector.broadcast %20 : vector<1x128xi32> to vector<16x128xi32>
    %23 = arith.cmpi eq, %21, %22 : vector<16x128xi32>
    %24 = arith.extui %23 : vector<16x128xi1> to vector<16x128xi32>
    %25 = arith.sitofp %24 : vector<16x128xi32> to vector<16x128xf32>
    %26 = arith.mulf %25, %18 : vector<16x128xf32>
    %cst_10 = arith.constant dense<0xFF800000> : vector<16xf32>
    %27 = vector.multi_reduction <maximumf>, %7, %cst_10 [1] : vector<16x128xf32> to vector<16xf32>
    %28 = vector.shape_cast %27 : vector<16xf32> to vector<16x1xf32>
    %29 = vector.broadcast %28 : vector<16x1xf32> to vector<16x128xf32>
    %30 = arith.subf %7, %29 : vector<16x128xf32>
    %31 = math.exp %30 : vector<16x128xf32>
    %32 = arith.mulf %31, %18 : vector<16x128xf32>
    %cst_11 = arith.constant dense<0.000000e+00> : vector<16xf32>
    %33 = vector.multi_reduction <add>, %32, %cst_11 [1] : vector<16x128xf32> to vector<16xf32>
    %34 = vector.shape_cast %33 : vector<16xf32> to vector<16x1xf32>
    %35 = math.log %34 : vector<16x1xf32>
    %36 = arith.mulf %26, %30 : vector<16x128xf32>
    %cst_12 = arith.constant dense<0.000000e+00> : vector<16xf32>
    %37 = vector.multi_reduction <add>, %36, %cst_12 [1] : vector<16x128xf32> to vector<16xf32>
    %38 = vector.shape_cast %37 : vector<16xf32> to vector<16x1xf32>
    %cst_13 = arith.constant dense<0.000000e+00> : vector<16xf32>
    %39 = vector.multi_reduction <add>, %26, %cst_13 [1] : vector<16x128xf32> to vector<16xf32>
    %40 = vector.shape_cast %39 : vector<16xf32> to vector<16x1xf32>
    %41 = vector.extract_strided_slice %11 {offsets = [0, 0], sizes = [16, 1], strides = [1, 1]} : vector<16x128xi32> to vector<16x1xi32>
    %c16_i32_14 = arith.constant 16 : i32
    %42 = vector.broadcast %c16_i32_14 : i32 to vector<16x1xi32>
    %43 = arith.cmpi slt, %41, %42 : vector<16x1xi32>
    %cst_15 = arith.constant 1.000000e+00 : f32
    %44 = vector.broadcast %cst_15 : f32 to vector<16x1xf32>
    %45 = arith.select %43, %40, %44 : vector<16x1xi1>, vector<16x1xf32>
    %46 = tpu.reciprocal %45 : vector<16x1xf32> -> vector<16x1xf32>
    %47 = arith.mulf %38, %46 : vector<16x1xf32>
    %48 = arith.subf %47, %35 : vector<16x1xf32>
    %cst_16 = arith.constant -7.14285707 : f32
    %49 = vector.broadcast %cst_16 : f32 to vector<16x1xf32>
    %50 = arith.mulf %49, %48 : vector<16x1xf32>
    %cst_17 = arith.constant 0.000000e+00 : f32
    %51 = vector.broadcast %cst_17 : f32 to vector<16x1xf32>
    %52 = arith.select %43, %50, %51 : vector<16x1xi1>, vector<16x1xf32>
    %53 = vector.shape_cast %52 : vector<16x1xf32> to vector<16x1xf32>
    %54 = vector.broadcast %53 : vector<16x1xf32> to vector<16x128xf32>
    %c0_18 = arith.constant 0 : index
    %c0_19 = arith.constant 0 : index
    %55 = vector.load %arg4[%c0_18, %c0_19] : memref<16x128xf32, #tpu.memory_space<vmem>>, vector<16x128xf32>
    tpu.vector_store %arg4[%c0_18, %c0_19], %54 {strides = array<i32>} : memref<16x128xf32, #tpu.memory_space<vmem>>, vector<16x128xf32>,
    return
  }
  func.func @transform_0(%arg0: i32) -> (i32, i32) {
    %c0_i32 = arith.constant 0 : i32
    %c0_i32_0 = arith.constant 0 : i32
    %c0_i32_1 = arith.constant 0 : i32
    return %c0_i32, %c0_i32_0 : i32, i32
  }
  func.func @transform_1(%arg0: i32) -> (i32, i32) {
    %c0_i32 = arith.constant 0 : i32
    %c0_i32_0 = arith.constant 0 : i32
    return %arg0, %c0_i32 : i32, i32
  }
  func.func @transform_2(%arg0: i32) -> (i32, i32) {
    %c0_i32 = arith.constant 0 : i32
    %c0_i32_0 = arith.constant 0 : i32
    %c0_i32_1 = arith.constant 0 : i32
    return %c0_i32, %c0_i32_0 : i32, i32
  }
  func.func @transform_3(%arg0: i32) -> (i32, i32) {
    %c0_i32 = arith.constant 0 : i32
    %c0_i32_0 = arith.constant 0 : i32
    return %arg0, %c0_i32 : i32, i32
  }
}

</mosaic_0001>

<llo_original>
// kernel: tpu_custom_call.1
$region0: #{tpu_custom_call.1}
  #allocation0 [shape = 'u32[]', space=smem, size = 0x4, offset = 0x4, fixed_abs, tag = 'smem constant byte address 0x4 - core index']
  #allocation1 [shape = 'u32[144,128]{1,0:T(1,128)}', space=vmem, size = 0x12000, scoped, tag = 'internal scratch']
  %s0 = inlined_call_operand.vmem [shape: s32[1,128], index: 0, kind: input, shape index: {}]
  %s1 = inlined_call_operand.vmem [shape: s32[16,1], index: 1, kind: input, shape index: {}]
  %s2 = inlined_call_operand.hbm [shape: f32[128,128], index: 2, kind: input, shape index: {}]
  %s3 = inlined_call_operand.hbm [shape: f32[16,128], index: 3, kind: output, shape index: {}]
  %s4 = sld [smem:[#allocation0]]
  $region26: #{tpu_custom_call.1} parent=0
    _
  %s6 = ssub.s32 1, %s4
  %s7 = scalar_select 0, %s6, %s4
  $region1: #{tpu_custom_call.1} parent=0
    #allocation2 [shape = 'u8[65536]{0}', space=vmem, size = 0x10000, scoped, tag = 'input window, operand 2, single buffered']
    #allocation3 [shape = 's32[1]{0}', space=sflag, size = 0x4, scoped, tag = 'scoped memory for tpu_custom_call.1']
    #allocation4 [shape = 's32[1]{0}', space=sflag, size = 0x4, scoped, tag = 'scoped memory for tpu_custom_call.1']
    #allocation5 [shape = 'u8[8192]{0}', space=vmem, size = 0x2000, scoped, tag = 'output window, operand 0, single buffered']
    %8 = vsyncpa [#allocation3], 0
    %9 = vsyncpa [#allocation4], 0
    // Predicated region
    $region2: #{tpu_custom_call.1} parent=1 // pred_check
      _
    $region3: #{tpu_custom_call.1} parent=1 // pred_check_branch
      %11 = sbr.rel (0) target = $region5
    $region4: #{tpu_custom_call.1} parent=1 // pred_region
      _
    $region5: #{tpu_custom_call.1} parent=1 // pred_fallthru
      _
    // Predicated region
    $region6: #{tpu_custom_call.1} parent=1 // pred_check
      _
    $region7: #{tpu_custom_call.1} parent=1 // pred_check_branch
      %13 = sbr.rel (0) target = $region9
    $region8: #{tpu_custom_call.1} parent=1 // pred_region
      _
    $region9: #{tpu_custom_call.1} parent=1 // pred_fallthru
      _
    // Predicated region
    $region10: #{tpu_custom_call.1} parent=1 // pred_check
      _
    $region11: #{tpu_custom_call.1} parent=1 // pred_check_branch
      %15 = sbr.rel (0) target = $region13
    $region12: #{tpu_custom_call.1} parent=1 // pred_region
      %s17 = ssub.s32 2048, 2048
      %18 = vsyncadd [#allocation3], %s17
      %s19 = sshll.u32 [#allocation2], 4
      %s20 = int_to_ptr.vmem [resolvable:$true] %s19
      %25 = dma.hbm_to_vmem [thread:$0]  %s2, 2048, %s20, [#allocation3], 128, 128, 8
    $region13: #{tpu_custom_call.1} parent=1 // pred_fallthru
      _
    // Predicated region
    $region14: #{tpu_custom_call.1} parent=1 // pred_check
      _
    $region15: #{tpu_custom_call.1} parent=1 // pred_check_branch
      %27 = sbr.rel (0) target = $region17
    $region16: #{tpu_custom_call.1} parent=1 // pred_region
      %28 = dma.done [#allocation3], 2048
    $region17: #{tpu_custom_call.1} parent=1 // pred_fallthru
      _
    %s29 = smul.u32 0, 16
    %s30 = scalar_lea.vmem [#allocation2], %s29
    %v31 = vld [vmem:[%s30] sm:$0xff]
    %v32 = vld [vmem:[%s30 + $0x8] sm:$0xff]
    %v33 = vld [vmem:[#allocation2] sm:$0xff]
    %v34 = vld [vmem:[#allocation2 + $0x8] sm:$0xff]
    %v35 = vld [vmem:[#allocation2 + $0x10] sm:$0xff]
    %v36 = vld [vmem:[#allocation2 + $0x18] sm:$0xff]
    %v37 = vld [vmem:[#allocation2 + $0x20] sm:$0xff]
    %v38 = vld [vmem:[#allocation2 + $0x28] sm:$0xff]
    %v39 = vld [vmem:[#allocation2 + $0x30] sm:$0xff]
    %v40 = vld [vmem:[#allocation2 + $0x38] sm:$0xff]
    %v41 = vld [vmem:[#allocation2 + $0x40] sm:$0xff]
    %v42 = vld [vmem:[#allocation2 + $0x48] sm:$0xff]
    %v43 = vld [vmem:[#allocation2 + $0x50] sm:$0xff]
    %v44 = vld [vmem:[#allocation2 + $0x58] sm:$0xff]
    %v45 = vld [vmem:[#allocation2 + $0x60] sm:$0xff]
    %v46 = vld [vmem:[#allocation2 + $0x68] sm:$0xff]
    %v47 = vld [vmem:[#allocation2 + $0x70] sm:$0xff]
    %v48 = vld [vmem:[#allocation2 + $0x78] sm:$0xff]
    %49 = vmatprep.subr.mxu0 0.0
    %50 = vmatpush1.xpose.msra.mxu0 %v33
    %51 = vmatprep.subr.mxu0 0.0
    %52 = vmatpush1.xpose.msra.mxu0 %v34
    %53 = vmatprep.subr.mxu0 0.0
    %54 = vmatpush1.xpose.msra.mxu0 %v35
    %55 = vmatprep.subr.mxu0 0.0
    %56 = vmatpush1.xpose.msra.mxu0 %v36
    %57 = vmatprep.subr.mxu0 0.0
    %58 = vmatpush1.xpose.msra.mxu0 %v37
    %59 = vmatprep.subr.mxu0 0.0
    %60 = vmatpush1.xpose.msra.mxu0 %v38
    %61 = vmatprep.subr.mxu0 0.0
    %62 = vmatpush1.xpose.msra.mxu0 %v39
    %63 = vmatprep.subr.mxu0 0.0
    %64 = vmatpush1.xpose.msra.mxu0 %v40
    %65 = vmatprep.subr.mxu0 0.0
    %66 = vmatpush1.xpose.msra.mxu0 %v41
    %67 = vmatprep.subr.mxu0 0.0
    %68 = vmatpush1.xpose.msra.mxu0 %v42
    %69 = vmatprep.subr.mxu0 0.0
    %70 = vmatpush1.xpose.msra.mxu0 %v43
    %71 = vmatprep.subr.mxu0 0.0
    %72 = vmatpush1.xpose.msra.mxu0 %v44
    %73 = vmatprep.subr.mxu0 0.0
    %74 = vmatpush1.xpose.msra.mxu0 %v45
    %75 = vmatprep.subr.mxu0 0.0
    %76 = vmatpush1.xpose.msra.mxu0 %v46
    %77 = vmatprep.subr.mxu0 0.0
    %78 = vmatpush1.xpose.msra.mxu0 %v47
    %79 = vmatprep.subr.mxu0 0.0
    %80 = vmatpush1.xpose.msra.mxu0 %v48
    %81 = vmatprep.subr.mxu0 0.0
    %82 = vmatpush1.xpose.msra.mxu0 0.0
    %83 = vmatprep.subr.mxu0 0.0
    %84 = vmatpush1.xpose.msra.mxu0 0.0
    %85 = vmatprep.subr.mxu0 0.0
    %86 = vmatpush1.xpose.msra.mxu0 0.0
    %87 = vmatprep.subr.mxu0 0.0
    %88 = vmatpush1.xpose.msra.mxu0 0.0
    %89 = vmatprep.subr.mxu0 0.0
    %90 = vmatpush1.xpose.msra.mxu0 0.0
    %91 = vmatprep.subr.mxu0 0.0
    %92 = vmatpush1.xpose.msra.mxu0 0.0
    %93 = vmatprep.subr.mxu0 0.0
    %94 = vmatpush1.xpose.msra.mxu0 0.0
    %95 = vmatprep.subr.mxu0 0.0
    %96 = vmatpush1.xpose.msra.mxu0 0.0
    %97 = vmatprep.subr.mxu0 0.0
    %98 = vmatpush1.xpose.msra.mxu0 0.0
    %99 = vmatprep.subr.mxu0 0.0
    %100 = vmatpush1.xpose.msra.mxu0 0.0
    %101 = vmatprep.subr.mxu0 0.0
    %102 = vmatpush1.xpose.msra.mxu0 0.0
    %103 = vmatprep.subr.mxu0 0.0
    %104 = vmatpush1.xpose.msra.mxu0 0.0
    %105 = vmatprep.subr.mxu0 0.0
    %106 = vmatpush1.xpose.msra.mxu0 0.0
    %107 = vmatprep.subr.mxu0 0.0
    %108 = vmatpush1.xpose.msra.mxu0 0.0
    %109 = vmatprep.subr.mxu0 0.0
    %110 = vmatpush1.xpose.msra.mxu0 0.0
    %111 = vmatprep.subr.mxu0 0.0
    %112 = vmatpush1.xpose.msra.mxu0 0.0
    %113 = vmatprep.mubr.f32.mxu0 0.0
    %114 = vmatmul.mubr.f32.gmra.mrb[0].mxu0 %v31
    %v115 = vpop.f32.mrb[0].mxu0
    %v116 = vadd.f32 0.0, %v115
    %v117 = vpop.f32.mrb[0].mxu0
    %118 = vmatprep.mubr.f32.mxu0 0.0
    %119 = vmatmul.mubr.f32.gmra.mrb[0].mxu0 %v32
    %v120 = vpop.f32.mrb[0].mxu0
    %v121 = vadd.f32 0.0, %v120
    %v122 = vpop.f32.mrb[0].mxu0
    %123 = vdwg.mxu0
    %v124 = vmul.f32 %v116, 2.0
    %v125 = vmul.f32 %v121, 2.0
    %v126 = vlaneseq
    %v127 = vand.u32 %v126, 127
    %v128 = vlaneseq
    %v129 = vshrl.u32 %v128, 7
    %v130 = vadd.s32 %v129, 8
    %v131 = vstv %s29
    %v132 = vadd.s32 %v129, %v131
    %v133 = vadd.s32 %v130, %v131
    %vm134 = vcmp.lt.s32.totalorder %v127, 16
    %vm135 = vcmp.ne.s32.totalorder %v132, %v127
    %vm136 = vcmp.ne.s32.totalorder %v133, %v127
    %vm137 = vmand %vm134, %vm135
    %vm138 = vmand %vm134, %vm136
    %v139 = vsel %vm137, 1.0, 0.0
    %v140 = vsel %vm138, 1.0, 0.0
    %v141 = vld [vmem:[%s1] sm:$0xff]
    %v142 = vld [vmem:[%s1 + $0x8] sm:$0xff]
    %v143 = vld [vmem:[%s0] sm:$0x1]
    %144 = vset.pattern.permute.xlu0 0
    %145 = vperm.xlu0 %144, %v141
    %v146 = vpop.permute.xlu0 %145
    %147 = vset.pattern.permute.xlu0 0
    %148 = vperm.xlu0 %147, %v142
    %v149 = vpop.permute.xlu0 %148
    %v150 = vlaneseq
    %v151 = vshrl.u32 %v150, 7
    %v152 = vsub.s32 0, %v151
    %v153 = vrot.slane %v143, %v152
    %vm154 = vcmp.eq.s32.totalorder %v146, %v153
    %vm155 = vcmp.eq.s32.totalorder %v149, %v153
    %v156 = vsel %vm154, 1, 0
    %v157 = vsel %vm155, 1, 0
    %v158 = vcvt.s32.f32 %v156
    %v159 = vcvt.s32.f32 %v157
    %v160 = vmul.f32 %v158, %v139
    %v161 = vmul.f32 %v159, %v140
    %162 = vmax.xlane.f32.xlu0 %v124
    %v163 = vpop.xlane.xlu0 %162
    %164 = vmax.xlane.f32.xlu0 %v125
    %v165 = vpop.xlane.xlu0 %164
    %v166 = vsub.f32 %v124, %v163
    %v167 = vsub.f32 %v125, %v165
    %v168 = vmul.f32 %v166, 1.442695
    %v169 = vpow.pop %v168
    %v170 = vmul.f32 %v167, 1.442695
    %v171 = vpow.pop %v170
    %v172 = vmul.f32 %v169, %v139
    %v173 = vmul.f32 %v171, %v140
    %174 = vadd.xlane.f32.xlu0 %v172
    %v175 = vpop.xlane.xlu0 %174
    %176 = vadd.xlane.f32.xlu0 %v173
    %v177 = vpop.xlane.xlu0 %176
    %v178 = vlog2.pop %v175
    %v179 = vmul.f32 %v178, 0.6931472
    %v180 = vlog2.pop %v177
    %v181 = vmul.f32 %v180, 0.6931472
    %v182 = vmul.f32 %v160, %v166
    %v183 = vmul.f32 %v161, %v167
    %184 = vadd.xlane.f32.xlu0 %v182
    %v185 = vpop.xlane.xlu0 %184
    %186 = vadd.xlane.f32.xlu0 %v183
    %v187 = vpop.xlane.xlu0 %186
    %188 = vadd.xlane.f32.xlu0 %v160
    %v189 = vpop.xlane.xlu0 %188
    %190 = vadd.xlane.f32.xlu0 %v161
    %v191 = vpop.xlane.xlu0 %190
    %vm192 = vcmp.lt.s32.totalorder %v132, 16
    %vm193 = vcmp.lt.s32.totalorder %v133, 16
    %v194 = vsel %vm192, %v189, 1.0
    %v195 = vsel %vm193, %v191, 1.0
    %v196 = vrcp.pop %v194
    %v197 = vrcp.pop %v195
    %v198 = vmul.f32 %v185, %v196
    %v199 = vmul.f32 %v187, %v197
    %v200 = vsub.f32 %v198, %v179
    %v201 = vsub.f32 %v199, %v181
    %v202 = vmul.f32 %v200, -7.142857
    %v203 = vmul.f32 %v201, -7.142857
    %v204 = vsel %vm192, %v202, 0.0
    %v205 = vsel %vm193, %v203, 0.0
    %206 = vst [vmem:[#allocation5] sm:$0xff] %v204
    %207 = vst [vmem:[#allocation5 + $0x8] sm:$0xff] %v205
    // Predicated region
    $region18: #{tpu_custom_call.1} parent=1 // pred_check
      _
    $region19: #{tpu_custom_call.1} parent=1 // pred_check_branch
      %209 = sbr.rel (0) target = $region21
    $region20: #{tpu_custom_call.1} parent=1 // pred_region
      %s211 = ssub.s32 256, 256
      %212 = vsyncadd [#allocation4], %s211
      %s213 = sshll.u32 [#allocation5], 4
      %s214 = int_to_ptr.vmem [resolvable:$true] %s213
      %219 = dma.vmem_to_hbm [thread:$0]  %s214, 256, %s3, [#allocation4], 128, 128, 8
    $region21: #{tpu_custom_call.1} parent=1 // pred_fallthru
      _
    // Predicated region
    $region22: #{tpu_custom_call.1} parent=1 // pred_check
      _
    $region23: #{tpu_custom_call.1} parent=1 // pred_check_branch
      %221 = sbr.rel (0) target = $region25
    $region24: #{tpu_custom_call.1} parent=1 // pred_region
      %222 = dma.done [#allocation4], 256
    $region25: #{tpu_custom_call.1} parent=1 // pred_fallthru
      _
    %223 = vsyncpa [#allocation3], 1
    %224 = vsyncpa [#allocation4], 1

</llo_original>
